<compile_context>
chip_gen: v7x
topology: tpu7x:2x2x1
jax: 0.10.0
libtpu: 0.0.40
codegen_flags: <defaults>
</compile_context>

<pallas_src>
import math

import jax
import jax.numpy as jnp
import numpy as np
from jax.experimental import pallas as pl
from jax.experimental.pallas import tpu as pltpu


# ---------------------------------------------------------------------------
# Kernel body
# ---------------------------------------------------------------------------
def _make_gcn_kernel(num_layers, n_node, mx_dtype):
    """Fused kernel: h = relu(adj @ (h @ W_l)) for l in range(num_layers)."""

    def kernel(obs_ref, *rest):
        w_refs = rest[:num_layers]
        out_ref = rest[num_layers]

        obs = obs_ref[...]                              # (TB, N, N + F0)
        tb = obs.shape[0]
        # Static lane slices of the single obs stream (review: no wrapper split).
        adj = obs[:, :, :n_node].astype(mx_dtype)       # (TB, N, N)  MXU operand
        h = obs[:, :, n_node:].astype(jnp.float32)      # (TB, N, F0) f32 state

        # Layer loop unrolled at trace time; h stays on-chip for the whole step.
        for w_ref in w_refs:
            w = w_ref[...].astype(mx_dtype)             # (Fin, Fout), read once
            fin, fout = w.shape
            # support = h @ W : one collapsed (TB*N, Fin)@(Fin, Fout) MXU matmul.
            # The leading-dim merge is layout-preserving when N % 8 == 0.
            support = jnp.dot(
                h.reshape(tb * n_node, fin).astype(mx_dtype), w,
                preferred_element_type=jnp.float32,
            ).reshape(tb, n_node, fout)
            # h = adj @ support : batched matmul on the MXU.
            h = jnp.einsum("bnk,bkf->bnf", adj, support.astype(mx_dtype),
                           preferred_element_type=jnp.float32)
            h = jnp.maximum(h, 0.0)                     # ReLU in f32 (VPU)

        out_ref[...] = h.astype(out_ref.dtype)          # (TB, N, Fout_last)

    return kernel


# ---------------------------------------------------------------------------
# Generation-aware VMEM budgeting and batch tiling
# ---------------------------------------------------------------------------
def _vmem_budget_bytes():
    """(working-set budget, vmem_limit ceiling) per TPU generation."""
    kind = ""
    try:
        kind = jax.devices()[0].device_kind.lower()
    except Exception:
        pass
    if "v7" in kind:
        # v7x: 64 MiB VMEM per TensorCore -> roughly half the v5e/v6e budget.
        return 24 << 20, 48 << 20
    if any(tag in kind for tag in ("v6", "v5", "v4", "v3")):
        # 128 MiB VMEM class.
        return 48 << 20, 96 << 20
    # Unknown device kind: be conservative (safe on every generation).
    return 24 << 20, 48 << 20


def _per_elem_vmem_bytes(n, total, f_max, f_out):
    # Per batch element, f32 bytes:
    #   obs block (x2 buffers) + out block (x2 buffers) + live intermediates
    #   (adj value + h + support) inside the kernel body.
    return 4 * (2 * n * total + 2 * n * f_out + n * n + 2 * n * f_max)


def _choose_tb(batch, per_elem, weight_bytes, budget_bytes):
    """Pick (TB, padded_batch).  Last two block dims always equal the full
    array dims, so TB itself is unconstrained by the (8, 128) rule."""
    avail = max(budget_bytes - 2 * weight_bytes, per_elem)
    tb_cap = max(1, avail // per_elem)

    if batch < 16:
        # Tiny batch: one full-batch step (block == full dims, always legal).
        return batch, batch

    # Guarantee >=2 grid steps (>=4 for larger batches) so the "parallel" axis
    # can shard across v7x's two TensorCores and pipelining has work to overlap.
    min_steps = 4 if batch >= 64 else 2
    nsteps = max(min_steps, math.ceil(batch / tb_cap))
    tb = math.ceil(batch / nsteps)                      # divisor-aware: pad < nsteps
    bp = math.ceil(batch / tb) * tb
    return tb, bp


# ---------------------------------------------------------------------------
# Wrapper
# ---------------------------------------------------------------------------
def gcn_forward(obs, weights, ip_node_num, feature_num, *,
                matmul_dtype=jnp.float32):
    """JAX/Pallas equivalent of GCN.forward (single fused kernel).

    obs:     (B, N, ip_node_num + feature_num) or (N, ip_node_num + feature_num)
    weights: list of (Fin_l, Fout_l) weight matrices
    matmul_dtype: dtype fed to the MXU (jnp.bfloat16 recommended on v6e/v7x);
                  accumulation and all VPU arithmetic stay in f32.
    """
    was_2d = obs.ndim == 2
    if was_2d:
        obs = obs[None]
    if not jnp.issubdtype(obs.dtype, jnp.floating):
        obs = obs.astype(jnp.float32)
    weights = [jnp.asarray(w, jnp.float32) for w in weights]

    B, N, total = obs.shape
    # torch.split(obs, [ip_node_num, feature_num]) + square adjacency requirement.
    assert N == ip_node_num, (N, ip_node_num)
    assert total == ip_node_num + feature_num, (total, ip_node_num, feature_num)

    num_layers = len(weights)
    f_dims = [feature_num] + [int(w.shape[1]) for w in weights]
    f_max = max(f_dims)
    fout_last = int(weights[-1].shape[1])
    weight_bytes = sum(int(np.prod(w.shape)) * 4 for w in weights)

    budget, vmem_cap = _vmem_budget_bytes()
    per_elem = _per_elem_vmem_bytes(N, total, f_max, fout_last)
    TB, Bp = _choose_tb(B, per_elem, weight_bytes, budget)
    if Bp > B:
        # Zero padding is safe: relu of zero rows is zero and is sliced away.
        obs = jnp.pad(obs, ((0, Bp - B), (0, 0), (0, 0)))

    est_vmem = per_elem * TB + 2 * weight_bytes + (8 << 20)
    vmem_limit = int(min(vmem_cap, max(32 << 20, est_vmem)))

    kernel = _make_gcn_kernel(num_layers, ip_node_num, matmul_dtype)

    # Single obs stream + single-buffered, VMEM-resident weights.
    in_specs = [pl.BlockSpec((TB, N, total), lambda b: (b, 0, 0))] + [
        pl.BlockSpec(tuple(int(d) for d in w.shape), lambda b: (0, 0),
                     pipeline_mode=pl.Buffered(1))
        for w in weights
    ]
    # 3-D output block: trailing dims equal full dims -> contiguous HBM region
    # per step; the flatten to (B, N*Fout) is a free reshape in the wrapper.
    out_specs = pl.BlockSpec((TB, N, fout_last), lambda b: (b, 0, 0))

    out = pl.pallas_call(
        kernel,
        out_shape=jax.ShapeDtypeStruct((Bp, N, fout_last), jnp.float32),
        grid_spec=pltpu.PrefetchScalarGridSpec(
            num_scalar_prefetch=0,
            grid=(Bp // TB,),
            in_specs=in_specs,
            out_specs=out_specs,
        ),
        compiler_params=pltpu.CompilerParams(
            dimension_semantics=("parallel",),
            vmem_limit_bytes=vmem_limit),
    )(obs, *weights)

    out = out[:B]
    if was_2d:
        return out.reshape(-1)                # torch.flatten(h_0)
    return out.reshape(B, N * fout_last)      # torch.flatten(h_0, 1)


# ---------------------------------------------------------------------------
# Reference + weight init
# ---------------------------------------------------------------------------
def init_gcn_weights(key, feature_num, n_hidden, num_layer):
    """SimpleGCN.reset_parameters: uniform(-1/sqrt(out_features), +...)."""
    shapes = []
    for i in range(num_layer):
        if i == 0:
            shapes.append((feature_num, n_hidden))
        elif i == num_layer - 1:
            shapes.append((n_hidden, feature_num))
        else:
            shapes.append((n_hidden, n_hidden))
    weights = []
    for shape in shapes:
        key, sub = jax.random.split(key)
        stdv = 1.0 / math.sqrt(shape[1])
        weights.append(
            jax.random.uniform(sub, shape, jnp.float32, minval=-stdv, maxval=stdv))
    return weights


def gcn_forward_ref(obs, weights, ip_node_num, feature_num,
                    matmul_dtype=jnp.float32):
    """Pure-JAX reference of GCN.forward (full-precision XLA matmuls)."""
    was_2d = obs.ndim == 2
    if was_2d:
        obs = obs[None]
    obs = obs.astype(jnp.float32)
    adj = obs[..., :ip_node_num].astype(matmul_dtype)
    h = obs[..., ip_node_num:ip_node_num + feature_num]
    hi = jax.lax.Precision.HIGHEST
    for w in weights:
        support = jnp.einsum("bnf,fk->bnk", h.astype(matmul_dtype),
                             w.astype(matmul_dtype),
                             preferred_element_type=jnp.float32, precision=hi)
        h = jnp.einsum("bnk,bkf->bnf", adj, support.astype(matmul_dtype),
                       preferred_element_type=jnp.float32, precision=hi)
        h = jnp.maximum(h, 0.0)
    out = h.reshape(h.shape[0], -1)
    return out.reshape(-1) if was_2d else out


# ---------------------------------------------------------------------------
# Self-test
# ---------------------------------------------------------------------------
if __name__ == "__main__":
    ip_node_num = 8          # adjacency is (N, N) with N == ip_node_num
    feature_num = 4
    n_hidden = 32
    num_layer = 3

    key = jax.random.PRNGKey(0)
    k_obs, k_obs2, k_obs3, k_w = jax.random.split(key, 4)
    weights = init_gcn_weights(k_w, feature_num, n_hidden, num_layer)

    # Tolerance covers possible MXU default-precision (bf16-grade) differences
    # between the XLA reference and the in-kernel matmuls; errors from a wrong
    # algorithm would be orders of magnitude larger.
    def check(obs, matmul_dtype=jnp.float32, rtol=2e-2, atol=2e-2):
        out = gcn_forward(obs, weights, ip_node_num, feature_num,
                          matmul_dtype=matmul_dtype)
        out = jax.block_until_ready(out)
        ref = gcn_forward_ref(obs, weights, ip_node_num, feature_num,
                              matmul_dtype=matmul_dtype)
        np.testing.assert_allclose(np.asarray(out), np.asarray(ref),
                                   rtol=rtol, atol=atol)
        assert bool(jnp.all(out >= 0.0))
        return out

    # (1) small 3-D batch: single full-batch grid step.
    obs3d = jax.random.uniform(
        k_obs, (2, ip_node_num, ip_node_num + feature_num), jnp.float32)
    o1 = check(obs3d)
    assert o1.shape == (2, ip_node_num * feature_num), o1.shape

    # (2) 2-D observation (no batch): fully flattened output.
    obs2d = jax.random.uniform(
        k_obs2, (ip_node_num, ip_node_num + feature_num), jnp.float32)
    o2 = check(obs2d)
    assert o2.shape == (ip_node_num * feature_num,), o2.shape

    # (3) larger batch (B=37): multi-step grid + divisor-aware batch padding.
    obs_big = jax.random.uniform(
        k_obs3, (37, ip_node_num, ip_node_num + feature_num), jnp.float32)
    o3 = check(obs_big)
    assert o3.shape == (37, ip_node_num * feature_num), o3.shape

    # (4) bf16 MXU-operand path (v6e/v7x bandwidth optimization), checked
    #     against a reference that applies the same casts.
    o4 = check(obs_big, matmul_dtype=jnp.bfloat16)
    assert o4.shape == (37, ip_node_num * feature_num), o4.shape

    print("KERNEL_OK")
</pallas_src>

<mosaic_0001>
module attributes {stable_mosaic.version = 11 : i64} {
  func.func @kernel(%arg0: i32, %arg1: memref<2x8x12xf32, #tpu.memory_space<vmem>>, %arg2: memref<4x32xf32, #tpu.memory_space<vmem>>, %arg3: memref<32x32xf32, #tpu.memory_space<vmem>>, %arg4: memref<32x4xf32, #tpu.memory_space<vmem>>, %arg5: memref<2x8x4xf32, #tpu.memory_space<vmem>>) attributes {dimension_semantics = [#tpu.dimension_semantics<parallel>], iteration_bounds = array<i64: 1>, scalar_prefetch = 0 : i64, scratch_operands = 0 : i64, tpu.core_type = #tpu.core_type<tc>, window_params = [{transform_indices = @transform_0, window_bounds = array<i64: 2, 8, 12>}, {pipeline_mode = #tpu.pipeline_mode<synchronous>, transform_indices = @transform_1, window_bounds = array<i64: 4, 32>}, {pipeline_mode = #tpu.pipeline_mode<synchronous>, transform_indices = @transform_2, window_bounds = array<i64: 32, 32>}, {pipeline_mode = #tpu.pipeline_mode<synchronous>, transform_indices = @transform_3, window_bounds = array<i64: 32, 4>}, {transform_indices = @transform_4, window_bounds = array<i64: 2, 8, 4>}]} {
    %c0 = arith.constant 0 : index
    %c0_0 = arith.constant 0 : index
    %c0_1 = arith.constant 0 : index
    %0 = vector.load %arg1[%c0, %c0_0, %c0_1] : memref<2x8x12xf32, #tpu.memory_space<vmem>>, vector<2x8x12xf32>
    %1 = vector.extract_strided_slice %0 {offsets = [0, 0, 0], sizes = [2, 8, 8], strides = [1, 1, 1]} : vector<2x8x12xf32> to vector<2x8x8xf32>
    %2 = vector.extract_strided_slice %0 {offsets = [0, 0, 8], sizes = [2, 8, 4], strides = [1, 1, 1]} : vector<2x8x12xf32> to vector<2x8x4xf32>
    %c0_2 = arith.constant 0 : index
    %c0_3 = arith.constant 0 : index
    %3 = vector.load %arg2[%c0_2, %c0_3] : memref<4x32xf32, #tpu.memory_space<vmem>>, vector<4x32xf32>
    %4 = vector.shape_cast %2 : vector<2x8x4xf32> to vector<16x4xf32>
    %cst = arith.constant dense<0.000000e+00> : vector<16x32xf32>
    %5 = tpu.matmul %4, %3, %cst {dimension_numbers = #tpu.dot_dimension_numbers<[1], [0], [0], [1], [0, 0, 1, 1], [], []>} : vector<16x4xf32>, vector<4x32xf32>, vector<16x32xf32> -> vector<16x32xf32>
    %6 = vector.shape_cast %5 : vector<16x32xf32> to vector<2x8x32xf32>
    "tpu.trace_start"() <{level = 10 : i32, message = "bnk,bkf->bnf"}> : () -> ()
    %cst_4 = arith.constant dense<0.000000e+00> : vector<2x8x32xf32>
    %7 = tpu.matmul %1, %6, %cst_4 {dimension_numbers = #tpu.dot_dimension_numbers<[2], [1], [1], [2], [0, 0, 0, 1, 1, 2], [0], [0]>} : vector<2x8x8xf32>, vector<2x8x32xf32>, vector<2x8x32xf32> -> vector<2x8x32xf32>
    "tpu.trace_stop"() : () -> ()
    %cst_5 = arith.constant 0.000000e+00 : f32
    %8 = vector.broadcast %cst_5 : f32 to vector<2x8x32xf32>
    %9 = arith.maximumf %7, %8 : vector<2x8x32xf32>
    %c0_6 = arith.constant 0 : index
    %c0_7 = arith.constant 0 : index
    %10 = vector.load %arg3[%c0_6, %c0_7] : memref<32x32xf32, #tpu.memory_space<vmem>>, vector<32x32xf32>
    %11 = vector.shape_cast %9 : vector<2x8x32xf32> to vector<16x32xf32>
    %cst_8 = arith.constant dense<0.000000e+00> : vector<16x32xf32>
    %12 = tpu.matmul %11, %10, %cst_8 {dimension_numbers = #tpu.dot_dimension_numbers<[1], [0], [0], [1], [0, 0, 1, 1], [], []>} : vector<16x32xf32>, vector<32x32xf32>, vector<16x32xf32> -> vector<16x32xf32>
    %13 = vector.shape_cast %12 : vector<16x32xf32> to vector<2x8x32xf32>
    "tpu.trace_start"() <{level = 10 : i32, message = "bnk,bkf->bnf"}> : () -> ()
    %cst_9 = arith.constant dense<0.000000e+00> : vector<2x8x32xf32>
    %14 = tpu.matmul %1, %13, %cst_9 {dimension_numbers = #tpu.dot_dimension_numbers<[2], [1], [1], [2], [0, 0, 0, 1, 1, 2], [0], [0]>} : vector<2x8x8xf32>, vector<2x8x32xf32>, vector<2x8x32xf32> -> vector<2x8x32xf32>
    "tpu.trace_stop"() : () -> ()
    %cst_10 = arith.constant 0.000000e+00 : f32
    %15 = vector.broadcast %cst_10 : f32 to vector<2x8x32xf32>
    %16 = arith.maximumf %14, %15 : vector<2x8x32xf32>
    %c0_11 = arith.constant 0 : index
    %c0_12 = arith.constant 0 : index
    %17 = vector.load %arg4[%c0_11, %c0_12] : memref<32x4xf32, #tpu.memory_space<vmem>>, vector<32x4xf32>
    %18 = vector.shape_cast %16 : vector<2x8x32xf32> to vector<16x32xf32>
    %cst_13 = arith.constant dense<0.000000e+00> : vector<16x4xf32>
    %19 = tpu.matmul %18, %17, %cst_13 {dimension_numbers = #tpu.dot_dimension_numbers<[1], [0], [0], [1], [0, 0, 1, 1], [], []>} : vector<16x32xf32>, vector<32x4xf32>, vector<16x4xf32> -> vector<16x4xf32>
    %20 = vector.shape_cast %19 : vector<16x4xf32> to vector<2x8x4xf32>
    "tpu.trace_start"() <{level = 10 : i32, message = "bnk,bkf->bnf"}> : () -> ()
    %cst_14 = arith.constant dense<0.000000e+00> : vector<2x8x4xf32>
    %21 = tpu.matmul %1, %20, %cst_14 {dimension_numbers = #tpu.dot_dimension_numbers<[2], [1], [1], [2], [0, 0, 0, 1, 1, 2], [0], [0]>} : vector<2x8x8xf32>, vector<2x8x4xf32>, vector<2x8x4xf32> -> vector<2x8x4xf32>
    "tpu.trace_stop"() : () -> ()
    %cst_15 = arith.constant 0.000000e+00 : f32
    %22 = vector.broadcast %cst_15 : f32 to vector<2x8x4xf32>
    %23 = arith.maximumf %21, %22 : vector<2x8x4xf32>
    %c0_16 = arith.constant 0 : index
    %c0_17 = arith.constant 0 : index
    %c0_18 = arith.constant 0 : index
    %24 = vector.load %arg5[%c0_16, %c0_17, %c0_18] : memref<2x8x4xf32, #tpu.memory_space<vmem>>, vector<2x8x4xf32>
    tpu.vector_store %arg5[%c0_16, %c0_17, %c0_18], %23 {strides = array<i32>} : memref<2x8x4xf32, #tpu.memory_space<vmem>>, vector<2x8x4xf32>,
    return
  }
  func.func @transform_0(%arg0: i32) -> (i32, i32, i32) {
    %c0_i32 = arith.constant 0 : i32
    %c0_i32_0 = arith.constant 0 : i32
    %c0_i32_1 = arith.constant 0 : i32
    return %arg0, %c0_i32, %c0_i32_0 : i32, i32, i32
  }
  func.func @transform_1(%arg0: i32) -> (i32, i32) {
    %c0_i32 = arith.constant 0 : i32
    %c0_i32_0 = arith.constant 0 : i32
    %c0_i32_1 = arith.constant 0 : i32
    return %c0_i32, %c0_i32_0 : i32, i32
  }
  func.func @transform_2(%arg0: i32) -> (i32, i32) {
    %c0_i32 = arith.constant 0 : i32
    %c0_i32_0 = arith.constant 0 : i32
    %c0_i32_1 = arith.constant 0 : i32
    return %c0_i32, %c0_i32_0 : i32, i32
  }
  func.func @transform_3(%arg0: i32) -> (i32, i32) {
    %c0_i32 = arith.constant 0 : i32
    %c0_i32_0 = arith.constant 0 : i32
    %c0_i32_1 = arith.constant 0 : i32
    return %c0_i32, %c0_i32_0 : i32, i32
  }
  func.func @transform_4(%arg0: i32) -> (i32, i32, i32) {
    %c0_i32 = arith.constant 0 : i32
    %c0_i32_0 = arith.constant 0 : i32
    %c0_i32_1 = arith.constant 0 : i32
    return %arg0, %c0_i32, %c0_i32_0 : i32, i32, i32
  }
}

</mosaic_0001>

<llo_original>
// kernel: tpu_custom_call.1
$region0: #{tpu_custom_call.1}
  #allocation0 [shape = 'u32[]', space=smem, size = 0x4, offset = 0x4, fixed_abs, tag = 'smem constant byte address 0x4 - core index']
  #allocation1 [shape = 'u32[144,128]{1,0:T(1,128)}', space=vmem, size = 0x12000, scoped, tag = 'internal scratch']
  %s0 = inlined_call_operand.hbm [shape: f32[2,8,12], index: 0, kind: input, shape index: {}]
  %s1 = inlined_call_operand.vmem [shape: f32[4,32], index: 1, kind: input, shape index: {}]
  %s2 = inlined_call_operand.vmem [shape: f32[32,32], index: 2, kind: input, shape index: {}]
  %s3 = inlined_call_operand.vmem [shape: f32[32,4], index: 3, kind: input, shape index: {}]
  %s4 = inlined_call_operand.vmem [shape: f32[2,8,4], index: 4, kind: output, shape index: {}]
  %s5 = sld [smem:[#allocation0]]
  $region30: #{tpu_custom_call.1} parent=0
    _
  %s7 = ssub.s32 1, %s5
  %s8 = scalar_select 0, %s7, %s5
  $region1: #{tpu_custom_call.1} parent=0
    #allocation2 [shape = 'u8[8192]{0}', space=vmem, size = 0x2000, scoped, tag = 'input window, operand 0, single buffered']
    #allocation3 [shape = 's32[1]{0}', space=sflag, size = 0x4, scoped, tag = 'scoped memory for tpu_custom_call.1']
    %9 = vsyncpa [#allocation3], 0
    // Predicated region
    $region2: #{tpu_custom_call.1} parent=1 // pred_check
      _
    $region3: #{tpu_custom_call.1} parent=1 // pred_check_branch
      %11 = sbr.rel (0) target = $region5
    $region4: #{tpu_custom_call.1} parent=1 // pred_region
      %s13 = ssub.s32 256, 256
      %14 = vsyncadd [#allocation3], %s13
      %s15 = sshll.u32 [#allocation2], 4
      %s16 = int_to_ptr.vmem [resolvable:$true] %s15
      %21 = dma.hbm_to_vmem [thread:$0]  %s0, 256, %s16, [#allocation3], 128, 128, 8
    $region5: #{tpu_custom_call.1} parent=1 // pred_fallthru
      _
    // Predicated region
    $region6: #{tpu_custom_call.1} parent=1 // pred_check
      _
    $region7: #{tpu_custom_call.1} parent=1 // pred_check_branch
      %23 = sbr.rel (0) target = $region9
    $region8: #{tpu_custom_call.1} parent=1 // pred_region
      _
    $region9: #{tpu_custom_call.1} parent=1 // pred_fallthru
      _
    // Predicated region
    $region10: #{tpu_custom_call.1} parent=1 // pred_check
      _
    $region11: #{tpu_custom_call.1} parent=1 // pred_check_branch
      %25 = sbr.rel (0) target = $region13
    $region12: #{tpu_custom_call.1} parent=1 // pred_region
      _
    $region13: #{tpu_custom_call.1} parent=1 // pred_fallthru
      _
    // Predicated region
    $region14: #{tpu_custom_call.1} parent=1 // pred_check
      _
    $region15: #{tpu_custom_call.1} parent=1 // pred_check_branch
      %27 = sbr.rel (0) target = $region17
    $region16: #{tpu_custom_call.1} parent=1 // pred_region
      _
    $region17: #{tpu_custom_call.1} parent=1 // pred_fallthru
      _
    // Predicated region
    $region18: #{tpu_custom_call.1} parent=1 // pred_check
      _
    $region19: #{tpu_custom_call.1} parent=1 // pred_check_branch
      %29 = sbr.rel (0) target = $region21
    $region20: #{tpu_custom_call.1} parent=1 // pred_region
      %30 = dma.done [#allocation3], 256
    $region21: #{tpu_custom_call.1} parent=1 // pred_fallthru
      _
    %v31 = vld [vmem:[#allocation2] sm:$0xff]
    %v32 = vld [vmem:[#allocation2 + $0x8] sm:$0xff]
    %v33 = vld [vmem:[%s1] sm:$0xf]
    %36 = vrot.lane.b32.xlu0 %v31, 120
    %v37 = vpop.permute.xlu0 %36
    %38 = vrot.lane.b32.xlu0 %v32, 120
    %v39 = vpop.permute.xlu0 %38
    %vm40 = vcmask 31744
    %v41 = vsel %vm40, %v37, 0
    %v43 = vsel %vm40, %v39, 0
    %vm45 = vcmask 1043456
    %v47 = vsel %vm45, %v33, 0
    %49 = vmatprep.subr.mxu0 0.0
    %50 = vmatpush1.msra.mxu0 %v47
    %51 = vmatprep.subr.mxu0 0.0
    %52 = vmatpush1.msra.mxu0 0.0
    %53 = vmatprep.subr.mxu0 0.0
    %54 = vmatpush1.msra.mxu0 0.0
    %55 = vmatprep.subr.mxu0 0.0
    %56 = vmatpush1.msra.mxu0 0.0
    %57 = vmatprep.subr.mxu0 0.0
    %58 = vmatpush1.msra.mxu0 0.0
    %59 = vmatprep.subr.mxu0 0.0
    %60 = vmatpush1.msra.mxu0 0.0
    %61 = vmatprep.subr.mxu0 0.0
    %62 = vmatpush1.msra.mxu0 0.0
    %63 = vmatprep.subr.mxu0 0.0
    %64 = vmatpush1.msra.mxu0 0.0
    %65 = vmatprep.subr.mxu0 0.0
    %66 = vmatpush1.msra.mxu0 0.0
    %67 = vmatprep.subr.mxu0 0.0
    %68 = vmatpush1.msra.mxu0 0.0
    %69 = vmatprep.subr.mxu0 0.0
    %70 = vmatpush1.msra.mxu0 0.0
    %71 = vmatprep.subr.mxu0 0.0
    %72 = vmatpush1.msra.mxu0 0.0
    %73 = vmatprep.subr.mxu0 0.0
    %74 = vmatpush1.msra.mxu0 0.0
    %75 = vmatprep.subr.mxu0 0.0
    %76 = vmatpush1.msra.mxu0 0.0
    %77 = vmatprep.subr.mxu0 0.0
    %78 = vmatpush1.msra.mxu0 0.0
    %79 = vmatprep.subr.mxu0 0.0
    %80 = vmatpush1.msra.mxu0 0.0
    %81 = vmatprep.subr.mxu0 0.0
    %82 = vmatpush1.msra.mxu0 0.0
    %83 = vmatprep.subr.mxu0 0.0
    %84 = vmatpush1.msra.mxu0 0.0
    %85 = vmatprep.subr.mxu0 0.0
    %86 = vmatpush1.msra.mxu0 0.0
    %87 = vmatprep.subr.mxu0 0.0
    %88 = vmatpush1.msra.mxu0 0.0
    %89 = vmatprep.subr.mxu0 0.0
    %90 = vmatpush1.msra.mxu0 0.0
    %91 = vmatprep.subr.mxu0 0.0
    %92 = vmatpush1.msra.mxu0 0.0
    %93 = vmatprep.subr.mxu0 0.0
    %94 = vmatpush1.msra.mxu0 0.0
    %95 = vmatprep.subr.mxu0 0.0
    %96 = vmatpush1.msra.mxu0 0.0
    %97 = vmatprep.subr.mxu0 0.0
    %98 = vmatpush1.msra.mxu0 0.0
    %99 = vmatprep.subr.mxu0 0.0
    %100 = vmatpush1.msra.mxu0 0.0
    %101 = vmatprep.subr.mxu0 0.0
    %102 = vmatpush1.msra.mxu0 0.0
    %103 = vmatprep.subr.mxu0 0.0
    %104 = vmatpush1.msra.mxu0 0.0
    %105 = vmatprep.subr.mxu0 0.0
    %106 = vmatpush1.msra.mxu0 0.0
    %107 = vmatprep.subr.mxu0 0.0
    %108 = vmatpush1.msra.mxu0 0.0
    %109 = vmatprep.subr.mxu0 0.0
    %110 = vmatpush1.msra.mxu0 0.0
    %111 = vmatprep.subr.mxu0 0.0
    %112 = vmatpush1.msra.mxu0 0.0
    %113 = vmatprep.mubr.f32.mxu0 0.0
    %114 = vmatmul.mubr.f32.gmra.mrb[0].mxu0 %v41
    %v115 = vpop.f32.mrb[0].mxu0
    %v116 = vadd.f32 0.0, %v115
    %v117 = vpop.f32.mrb[0].mxu0
    %118 = vmatprep.mubr.f32.mxu0 0.0
    %119 = vmatmul.mubr.f32.gmra.mrb[0].mxu0 %v43
    %v120 = vpop.f32.mrb[0].mxu0
    %v121 = vadd.f32 0.0, %v120
    %v122 = vpop.f32.mrb[0].mxu0
    %123 = vdwg.mxu0
    %vm124 = vcmask 64512
    %v125 = vsel %vm124, %v31, 0
    %127 = vmatprep.subr.mxu0 0.0
    %128 = vmatpush1.msra.mxu0 %v116
    %129 = vmatprep.subr.mxu0 0.0
    %130 = vmatpush1.msra.mxu0 0.0
    %131 = vmatprep.subr.mxu0 0.0
    %132 = vmatpush1.msra.mxu0 0.0
    %133 = vmatprep.subr.mxu0 0.0
    %134 = vmatpush1.msra.mxu0 0.0
    %135 = vmatprep.subr.mxu0 0.0
    %136 = vmatpush1.msra.mxu0 0.0
    %137 = vmatprep.subr.mxu0 0.0
    %138 = vmatpush1.msra.mxu0 0.0
    %139 = vmatprep.subr.mxu0 0.0
    %140 = vmatpush1.msra.mxu0 0.0
    %141 = vmatprep.subr.mxu0 0.0
    %142 = vmatpush1.msra.mxu0 0.0
    %143 = vmatprep.subr.mxu0 0.0
    %144 = vmatpush1.msra.mxu0 0.0
    %145 = vmatprep.subr.mxu0 0.0
    %146 = vmatpush1.msra.mxu0 0.0
    %147 = vmatprep.subr.mxu0 0.0
    %148 = vmatpush1.msra.mxu0 0.0
    %149 = vmatprep.subr.mxu0 0.0
    %150 = vmatpush1.msra.mxu0 0.0
    %151 = vmatprep.subr.mxu0 0.0
    %152 = vmatpush1.msra.mxu0 0.0
    %153 = vmatprep.subr.mxu0 0.0
    %154 = vmatpush1.msra.mxu0 0.0
    %155 = vmatprep.subr.mxu0 0.0
    %156 = vmatpush1.msra.mxu0 0.0
    %157 = vmatprep.subr.mxu0 0.0
    %158 = vmatpush1.msra.mxu0 0.0
    %159 = vmatprep.subr.mxu0 0.0
    %160 = vmatpush1.msra.mxu0 0.0
    %161 = vmatprep.subr.mxu0 0.0
    %162 = vmatpush1.msra.mxu0 0.0
    %163 = vmatprep.subr.mxu0 0.0
    %164 = vmatpush1.msra.mxu0 0.0
    %165 = vmatprep.subr.mxu0 0.0
    %166 = vmatpush1.msra.mxu0 0.0
    %167 = vmatprep.subr.mxu0 0.0
    %168 = vmatpush1.msra.mxu0 0.0
    %169 = vmatprep.subr.mxu0 0.0
    %170 = vmatpush1.msra.mxu0 0.0
    %171 = vmatprep.subr.mxu0 0.0
    %172 = vmatpush1.msra.mxu0 0.0
    %173 = vmatprep.subr.mxu0 0.0
    %174 = vmatpush1.msra.mxu0 0.0
    %175 = vmatprep.subr.mxu0 0.0
    %176 = vmatpush1.msra.mxu0 0.0
    %177 = vmatprep.subr.mxu0 0.0
    %178 = vmatpush1.msra.mxu0 0.0
    %179 = vmatprep.subr.mxu0 0.0
    %180 = vmatpush1.msra.mxu0 0.0
    %181 = vmatprep.subr.mxu0 0.0
    %182 = vmatpush1.msra.mxu0 0.0
    %183 = vmatprep.subr.mxu0 0.0
    %184 = vmatpush1.msra.mxu0 0.0
    %185 = vmatprep.subr.mxu0 0.0
    %186 = vmatpush1.msra.mxu0 0.0
    %187 = vmatprep.subr.mxu0 0.0
    %188 = vmatpush1.msra.mxu0 0.0
    %189 = vmatprep.subr.mxu0 0.0
    %190 = vmatpush1.msra.mxu0 0.0
    %191 = vmatprep.mubr.f32.mxu0 0.0
    %192 = vmatmul.mubr.f32.gmra.mrb[0].mxu0 %v125
    %v193 = vpop.f32.mrb[0].mxu0
    %v194 = vadd.f32 0.0, %v193
    %v195 = vpop.f32.mrb[0].mxu0
    %196 = vdwg.mxu0
    %v197 = vsel %vm124, %v32, 0
    %199 = vmatprep.subr.mxu0 0.0
    %200 = vmatpush1.msra.mxu0 %v121
    %201 = vmatprep.subr.mxu0 0.0
    %202 = vmatpush1.msra.mxu0 0.0
    %203 = vmatprep.subr.mxu0 0.0
    %204 = vmatpush1.msra.mxu0 0.0
    %205 = vmatprep.subr.mxu0 0.0
    %206 = vmatpush1.msra.mxu0 0.0
    %207 = vmatprep.subr.mxu0 0.0
    %208 = vmatpush1.msra.mxu0 0.0
    %209 = vmatprep.subr.mxu0 0.0
    %210 = vmatpush1.msra.mxu0 0.0
    %211 = vmatprep.subr.mxu0 0.0
    %212 = vmatpush1.msra.mxu0 0.0
    %213 = vmatprep.subr.mxu0 0.0
    %214 = vmatpush1.msra.mxu0 0.0
    %215 = vmatprep.subr.mxu0 0.0
    %216 = vmatpush1.msra.mxu0 0.0
    %217 = vmatprep.subr.mxu0 0.0
    %218 = vmatpush1.msra.mxu0 0.0
    %219 = vmatprep.subr.mxu0 0.0
    %220 = vmatpush1.msra.mxu0 0.0
    %221 = vmatprep.subr.mxu0 0.0
    %222 = vmatpush1.msra.mxu0 0.0
    %223 = vmatprep.subr.mxu0 0.0
    %224 = vmatpush1.msra.mxu0 0.0
    %225 = vmatprep.subr.mxu0 0.0
    %226 = vmatpush1.msra.mxu0 0.0
    %227 = vmatprep.subr.mxu0 0.0
    %228 = vmatpush1.msra.mxu0 0.0
    %229 = vmatprep.subr.mxu0 0.0
    %230 = vmatpush1.msra.mxu0 0.0
    %231 = vmatprep.subr.mxu0 0.0
    %232 = vmatpush1.msra.mxu0 0.0
    %233 = vmatprep.subr.mxu0 0.0
    %234 = vmatpush1.msra.mxu0 0.0
    %235 = vmatprep.subr.mxu0 0.0
    %236 = vmatpush1.msra.mxu0 0.0
    %237 = vmatprep.subr.mxu0 0.0
    %238 = vmatpush1.msra.mxu0 0.0
    %239 = vmatprep.subr.mxu0 0.0
    %240 = vmatpush1.msra.mxu0 0.0
    %241 = vmatprep.subr.mxu0 0.0
    %242 = vmatpush1.msra.mxu0 0.0
    %243 = vmatprep.subr.mxu0 0.0
    %244 = vmatpush1.msra.mxu0 0.0
    %245 = vmatprep.subr.mxu0 0.0
    %246 = vmatpush1.msra.mxu0 0.0
    %247 = vmatprep.subr.mxu0 0.0
    %248 = vmatpush1.msra.mxu0 0.0
    %249 = vmatprep.subr.mxu0 0.0
    %250 = vmatpush1.msra.mxu0 0.0
    %251 = vmatprep.subr.mxu0 0.0
    %252 = vmatpush1.msra.mxu0 0.0
    %253 = vmatprep.subr.mxu0 0.0
    %254 = vmatpush1.msra.mxu0 0.0
    %255 = vmatprep.subr.mxu0 0.0
    %256 = vmatpush1.msra.mxu0 0.0
    %257 = vmatprep.subr.mxu0 0.0
    %258 = vmatpush1.msra.mxu0 0.0
    %259 = vmatprep.subr.mxu0 0.0
    %260 = vmatpush1.msra.mxu0 0.0
    %261 = vmatprep.subr.mxu0 0.0
    %262 = vmatpush1.msra.mxu0 0.0
    %263 = vmatprep.mubr.f32.mxu0 0.0
    %264 = vmatmul.mubr.f32.gmra.mrb[0].mxu0 %v197
    %v265 = vpop.f32.mrb[0].mxu0
    %v266 = vadd.f32 0.0, %v265
    %v267 = vpop.f32.mrb[0].mxu0
    %268 = vdwg.mxu0
    %v269 = vmax.f32 %v194, 0.0
    %v270 = vmax.f32 %v266, 0.0
    %v271 = vld [vmem:[%s2] sm:$0xff]
    %v272 = vld [vmem:[%s2 + $0x8] sm:$0xff]
    %v273 = vld [vmem:[%s2 + $0x10] sm:$0xff]
    %v274 = vld [vmem:[%s2 + $0x18] sm:$0xff]
    %vm275 = vcmask 261120
    %v277 = vsel %vm275, %v269, 0
    %v280 = vsel %vm275, %v270, 0
    %282 = vmatprep.subr.mxu0 0.0
    %283 = vmatpush1.msra.mxu0 %v271
    %284 = vmatprep.subr.mxu0 0.0
    %285 = vmatpush1.msra.mxu0 %v272
    %286 = vmatprep.subr.mxu0 0.0
    %287 = vmatpush1.msra.mxu0 %v273
    %288 = vmatprep.subr.mxu0 0.0
    %289 = vmatpush1.msra.mxu0 %v274
    %290 = vmatprep.subr.mxu0 0.0
    %291 = vmatpush1.msra.mxu0 0.0
    %292 = vmatprep.subr.mxu0 0.0
    %293 = vmatpush1.msra.mxu0 0.0
    %294 = vmatprep.subr.mxu0 0.0
    %295 = vmatpush1.msra.mxu0 0.0
    %296 = vmatprep.subr.mxu0 0.0
    %297 = vmatpush1.msra.mxu0 0.0
    %298 = vmatprep.subr.mxu0 0.0
    %299 = vmatpush1.msra.mxu0 0.0
    %300 = vmatprep.subr.mxu0 0.0
    %301 = vmatpush1.msra.mxu0 0.0
    %302 = vmatprep.subr.mxu0 0.0
    %303 = vmatpush1.msra.mxu0 0.0
    %304 = vmatprep.subr.mxu0 0.0
    %305 = vmatpush1.msra.mxu0 0.0
    %306 = vmatprep.subr.mxu0 0.0
    %307 = vmatpush1.msra.mxu0 0.0
    %308 = vmatprep.subr.mxu0 0.0
    %309 = vmatpush1.msra.mxu0 0.0
    %310 = vmatprep.subr.mxu0 0.0
    %311 = vmatpush1.msra.mxu0 0.0
    %312 = vmatprep.subr.mxu0 0.0
    %313 = vmatpush1.msra.mxu0 0.0
    %314 = vmatprep.subr.mxu0 0.0
    %315 = vmatpush1.msra.mxu0 0.0
    %316 = vmatprep.subr.mxu0 0.0
    %317 = vmatpush1.msra.mxu0 0.0
    %318 = vmatprep.subr.mxu0 0.0
    %319 = vmatpush1.msra.mxu0 0.0
    %320 = vmatprep.subr.mxu0 0.0
    %321 = vmatpush1.msra.mxu0 0.0
    %322 = vmatprep.subr.mxu0 0.0
    %323 = vmatpush1.msra.mxu0 0.0
    %324 = vmatprep.subr.mxu0 0.0
    %325 = vmatpush1.msra.mxu0 0.0
    %326 = vmatprep.subr.mxu0 0.0
    %327 = vmatpush1.msra.mxu0 0.0
    %328 = vmatprep.subr.mxu0 0.0
    %329 = vmatpush1.msra.mxu0 0.0
    %330 = vmatprep.subr.mxu0 0.0
    %331 = vmatpush1.msra.mxu0 0.0
    %332 = vmatprep.subr.mxu0 0.0
    %333 = vmatpush1.msra.mxu0 0.0
    %334 = vmatprep.subr.mxu0 0.0
    %335 = vmatpush1.msra.mxu0 0.0
    %336 = vmatprep.subr.mxu0 0.0
    %337 = vmatpush1.msra.mxu0 0.0
    %338 = vmatprep.subr.mxu0 0.0
    %339 = vmatpush1.msra.mxu0 0.0
    %340 = vmatprep.subr.mxu0 0.0
    %341 = vmatpush1.msra.mxu0 0.0
    %342 = vmatprep.subr.mxu0 0.0
    %343 = vmatpush1.msra.mxu0 0.0
    %344 = vmatprep.subr.mxu0 0.0
    %345 = vmatpush1.msra.mxu0 0.0
    %346 = vmatprep.mubr.f32.mxu0 0.0
    %347 = vmatmul.mubr.f32.gmra.mrb[0].mxu0 %v277
    %v348 = vpop.f32.mrb[0].mxu0
    %v349 = vadd.f32 0.0, %v348
    %v350 = vpop.f32.mrb[0].mxu0
    %351 = vmatprep.mubr.f32.mxu0 0.0
    %352 = vmatmul.mubr.f32.gmra.mrb[0].mxu0 %v280
    %v353 = vpop.f32.mrb[0].mxu0
    %v354 = vadd.f32 0.0, %v353
    %v355 = vpop.f32.mrb[0].mxu0
    %356 = vdwg.mxu0
    %357 = vmatprep.subr.mxu0 0.0
    %358 = vmatpush1.msra.mxu0 %v349
    %359 = vmatprep.subr.mxu0 0.0
    %360 = vmatpush1.msra.mxu0 0.0
    %361 = vmatprep.subr.mxu0 0.0
    %362 = vmatpush1.msra.mxu0 0.0
    %363 = vmatprep.subr.mxu0 0.0
    %364 = vmatpush1.msra.mxu0 0.0
    %365 = vmatprep.subr.mxu0 0.0
    %366 = vmatpush1.msra.mxu0 0.0
    %367 = vmatprep.subr.mxu0 0.0
    %368 = vmatpush1.msra.mxu0 0.0
    %369 = vmatprep.subr.mxu0 0.0
    %370 = vmatpush1.msra.mxu0 0.0
    %371 = vmatprep.subr.mxu0 0.0
    %372 = vmatpush1.msra.mxu0 0.0
    %373 = vmatprep.subr.mxu0 0.0
    %374 = vmatpush1.msra.mxu0 0.0
    %375 = vmatprep.subr.mxu0 0.0
    %376 = vmatpush1.msra.mxu0 0.0
    %377 = vmatprep.subr.mxu0 0.0
    %378 = vmatpush1.msra.mxu0 0.0
    %379 = vmatprep.subr.mxu0 0.0
    %380 = vmatpush1.msra.mxu0 0.0
    %381 = vmatprep.subr.mxu0 0.0
    %382 = vmatpush1.msra.mxu0 0.0
    %383 = vmatprep.subr.mxu0 0.0
    %384 = vmatpush1.msra.mxu0 0.0
    %385 = vmatprep.subr.mxu0 0.0
    %386 = vmatpush1.msra.mxu0 0.0
    %387 = vmatprep.subr.mxu0 0.0
    %388 = vmatpush1.msra.mxu0 0.0
    %389 = vmatprep.subr.mxu0 0.0
    %390 = vmatpush1.msra.mxu0 0.0
    %391 = vmatprep.subr.mxu0 0.0
    %392 = vmatpush1.msra.mxu0 0.0
    %393 = vmatprep.subr.mxu0 0.0
    %394 = vmatpush1.msra.mxu0 0.0
    %395 = vmatprep.subr.mxu0 0.0
    %396 = vmatpush1.msra.mxu0 0.0
    %397 = vmatprep.subr.mxu0 0.0
    %398 = vmatpush1.msra.mxu0 0.0
    %399 = vmatprep.subr.mxu0 0.0
    %400 = vmatpush1.msra.mxu0 0.0
    %401 = vmatprep.subr.mxu0 0.0
    %402 = vmatpush1.msra.mxu0 0.0
    %403 = vmatprep.subr.mxu0 0.0
    %404 = vmatpush1.msra.mxu0 0.0
    %405 = vmatprep.subr.mxu0 0.0
    %406 = vmatpush1.msra.mxu0 0.0
    %407 = vmatprep.subr.mxu0 0.0
    %408 = vmatpush1.msra.mxu0 0.0
    %409 = vmatprep.subr.mxu0 0.0
    %410 = vmatpush1.msra.mxu0 0.0
    %411 = vmatprep.subr.mxu0 0.0
    %412 = vmatpush1.msra.mxu0 0.0
    %413 = vmatprep.subr.mxu0 0.0
    %414 = vmatpush1.msra.mxu0 0.0
    %415 = vmatprep.subr.mxu0 0.0
    %416 = vmatpush1.msra.mxu0 0.0
    %417 = vmatprep.subr.mxu0 0.0
    %418 = vmatpush1.msra.mxu0 0.0
    %419 = vmatprep.subr.mxu0 0.0
    %420 = vmatpush1.msra.mxu0 0.0
    %421 = vmatprep.mubr.f32.mxu0 0.0
    %422 = vmatmul.mubr.f32.gmra.mrb[0].mxu0 %v125
    %v423 = vpop.f32.mrb[0].mxu0
    %v424 = vadd.f32 0.0, %v423
    %v425 = vpop.f32.mrb[0].mxu0
    %426 = vdwg.mxu0
    %427 = vmatprep.subr.mxu0 0.0
    %428 = vmatpush1.msra.mxu0 %v354
    %429 = vmatprep.subr.mxu0 0.0
    %430 = vmatpush1.msra.mxu0 0.0
    %431 = vmatprep.subr.mxu0 0.0
    %432 = vmatpush1.msra.mxu0 0.0
    %433 = vmatprep.subr.mxu0 0.0
    %434 = vmatpush1.msra.mxu0 0.0
    %435 = vmatprep.subr.mxu0 0.0
    %436 = vmatpush1.msra.mxu0 0.0
    %437 = vmatprep.subr.mxu0 0.0
    %438 = vmatpush1.msra.mxu0 0.0
    %439 = vmatprep.subr.mxu0 0.0
    %440 = vmatpush1.msra.mxu0 0.0
    %441 = vmatprep.subr.mxu0 0.0
    %442 = vmatpush1.msra.mxu0 0.0
    %443 = vmatprep.subr.mxu0 0.0
    %444 = vmatpush1.msra.mxu0 0.0
    %445 = vmatprep.subr.mxu0 0.0
    %446 = vmatpush1.msra.mxu0 0.0
    %447 = vmatprep.subr.mxu0 0.0
    %448 = vmatpush1.msra.mxu0 0.0
    %449 = vmatprep.subr.mxu0 0.0
    %450 = vmatpush1.msra.mxu0 0.0
    %451 = vmatprep.subr.mxu0 0.0
    %452 = vmatpush1.msra.mxu0 0.0
    %453 = vmatprep.subr.mxu0 0.0
    %454 = vmatpush1.msra.mxu0 0.0
    %455 = vmatprep.subr.mxu0 0.0
    %456 = vmatpush1.msra.mxu0 0.0
    %457 = vmatprep.subr.mxu0 0.0
    %458 = vmatpush1.msra.mxu0 0.0
    %459 = vmatprep.subr.mxu0 0.0
    %460 = vmatpush1.msra.mxu0 0.0
    %461 = vmatprep.subr.mxu0 0.0
    %462 = vmatpush1.msra.mxu0 0.0
    %463 = vmatprep.subr.mxu0 0.0
    %464 = vmatpush1.msra.mxu0 0.0
    %465 = vmatprep.subr.mxu0 0.0
    %466 = vmatpush1.msra.mxu0 0.0
    %467 = vmatprep.subr.mxu0 0.0
    %468 = vmatpush1.msra.mxu0 0.0
    %469 = vmatprep.subr.mxu0 0.0
    %470 = vmatpush1.msra.mxu0 0.0
    %471 = vmatprep.subr.mxu0 0.0
    %472 = vmatpush1.msra.mxu0 0.0
    %473 = vmatprep.subr.mxu0 0.0
    %474 = vmatpush1.msra.mxu0 0.0
    %475 = vmatprep.subr.mxu0 0.0
    %476 = vmatpush1.msra.mxu0 0.0
    %477 = vmatprep.subr.mxu0 0.0
    %478 = vmatpush1.msra.mxu0 0.0
    %479 = vmatprep.subr.mxu0 0.0
    %480 = vmatpush1.msra.mxu0 0.0
    %481 = vmatprep.subr.mxu0 0.0
    %482 = vmatpush1.msra.mxu0 0.0
    %483 = vmatprep.subr.mxu0 0.0
    %484 = vmatpush1.msra.mxu0 0.0
    %485 = vmatprep.subr.mxu0 0.0
    %486 = vmatpush1.msra.mxu0 0.0
    %487 = vmatprep.subr.mxu0 0.0
    %488 = vmatpush1.msra.mxu0 0.0
    %489 = vmatprep.subr.mxu0 0.0
    %490 = vmatpush1.msra.mxu0 0.0
    %491 = vmatprep.mubr.f32.mxu0 0.0
    %492 = vmatmul.mubr.f32.gmra.mrb[0].mxu0 %v197
    %v493 = vpop.f32.mrb[0].mxu0
    %v494 = vadd.f32 0.0, %v493
    %v495 = vpop.f32.mrb[0].mxu0
    %496 = vdwg.mxu0
    %v497 = vmax.f32 %v424, 0.0
    %v498 = vmax.f32 %v494, 0.0
    %v499 = vld [vmem:[%s3] sm:$0xff]
    %v500 = vld [vmem:[%s3 + $0x8] sm:$0xff]
    %v501 = vld [vmem:[%s3 + $0x10] sm:$0xff]
    %v502 = vld [vmem:[%s3 + $0x18] sm:$0xff]
    %v504 = vsel %vm275, %v497, 0
    %v507 = vsel %vm275, %v498, 0
    %509 = vmatprep.subr.mxu0 0.0
    %510 = vmatpush1.msra.mxu0 %v499
    %511 = vmatprep.subr.mxu0 0.0
    %512 = vmatpush1.msra.mxu0 %v500
    %513 = vmatprep.subr.mxu0 0.0
    %514 = vmatpush1.msra.mxu0 %v501
    %515 = vmatprep.subr.mxu0 0.0
    %516 = vmatpush1.msra.mxu0 %v502
    %517 = vmatprep.subr.mxu0 0.0
    %518 = vmatpush1.msra.mxu0 0.0
    %519 = vmatprep.subr.mxu0 0.0
    %520 = vmatpush1.msra.mxu0 0.0
    %521 = vmatprep.subr.mxu0 0.0
    %522 = vmatpush1.msra.mxu0 0.0
    %523 = vmatprep.subr.mxu0 0.0
    %524 = vmatpush1.msra.mxu0 0.0
    %525 = vmatprep.subr.mxu0 0.0
    %526 = vmatpush1.msra.mxu0 0.0
    %527 = vmatprep.subr.mxu0 0.0
    %528 = vmatpush1.msra.mxu0 0.0
    %529 = vmatprep.subr.mxu0 0.0
    %530 = vmatpush1.msra.mxu0 0.0
    %531 = vmatprep.subr.mxu0 0.0
    %532 = vmatpush1.msra.mxu0 0.0
    %533 = vmatprep.subr.mxu0 0.0
    %534 = vmatpush1.msra.mxu0 0.0
    %535 = vmatprep.subr.mxu0 0.0
    %536 = vmatpush1.msra.mxu0 0.0
    %537 = vmatprep.subr.mxu0 0.0
    %538 = vmatpush1.msra.mxu0 0.0
    %539 = vmatprep.subr.mxu0 0.0
    %540 = vmatpush1.msra.mxu0 0.0
    %541 = vmatprep.subr.mxu0 0.0
    %542 = vmatpush1.msra.mxu0 0.0
    %543 = vmatprep.subr.mxu0 0.0
    %544 = vmatpush1.msra.mxu0 0.0
    %545 = vmatprep.subr.mxu0 0.0
    %546 = vmatpush1.msra.mxu0 0.0
    %547 = vmatprep.subr.mxu0 0.0
    %548 = vmatpush1.msra.mxu0 0.0
    %549 = vmatprep.subr.mxu0 0.0
    %550 = vmatpush1.msra.mxu0 0.0
    %551 = vmatprep.subr.mxu0 0.0
    %552 = vmatpush1.msra.mxu0 0.0
    %553 = vmatprep.subr.mxu0 0.0
    %554 = vmatpush1.msra.mxu0 0.0
    %555 = vmatprep.subr.mxu0 0.0
    %556 = vmatpush1.msra.mxu0 0.0
    %557 = vmatprep.subr.mxu0 0.0
    %558 = vmatpush1.msra.mxu0 0.0
    %559 = vmatprep.subr.mxu0 0.0
    %560 = vmatpush1.msra.mxu0 0.0
    %561 = vmatprep.subr.mxu0 0.0
    %562 = vmatpush1.msra.mxu0 0.0
    %563 = vmatprep.subr.mxu0 0.0
    %564 = vmatpush1.msra.mxu0 0.0
    %565 = vmatprep.subr.mxu0 0.0
    %566 = vmatpush1.msra.mxu0 0.0
    %567 = vmatprep.subr.mxu0 0.0
    %568 = vmatpush1.msra.mxu0 0.0
    %569 = vmatprep.subr.mxu0 0.0
    %570 = vmatpush1.msra.mxu0 0.0
    %571 = vmatprep.subr.mxu0 0.0
    %572 = vmatpush1.msra.mxu0 0.0
    %573 = vmatprep.mubr.f32.mxu0 0.0
    %574 = vmatmul.mubr.f32.gmra.mrb[0].mxu0 %v504
    %v575 = vpop.f32.mrb[0].mxu0
    %v576 = vadd.f32 0.0, %v575
    %v577 = vpop.f32.mrb[0].mxu0
    %578 = vmatprep.mubr.f32.mxu0 0.0
    %579 = vmatmul.mubr.f32.gmra.mrb[0].mxu0 %v507
    %v580 = vpop.f32.mrb[0].mxu0
    %v581 = vadd.f32 0.0, %v580
    %v582 = vpop.f32.mrb[0].mxu0
    %583 = vdwg.mxu0
    %584 = vmatprep.subr.mxu0 0.0
    %585 = vmatpush1.msra.mxu0 %v576
    %586 = vmatprep.subr.mxu0 0.0
    %587 = vmatpush1.msra.mxu0 0.0
    %588 = vmatprep.subr.mxu0 0.0
    %589 = vmatpush1.msra.mxu0 0.0
    %590 = vmatprep.subr.mxu0 0.0
    %591 = vmatpush1.msra.mxu0 0.0
    %592 = vmatprep.subr.mxu0 0.0
    %593 = vmatpush1.msra.mxu0 0.0
    %594 = vmatprep.subr.mxu0 0.0
    %595 = vmatpush1.msra.mxu0 0.0
    %596 = vmatprep.subr.mxu0 0.0
    %597 = vmatpush1.msra.mxu0 0.0
    %598 = vmatprep.subr.mxu0 0.0
    %599 = vmatpush1.msra.mxu0 0.0
    %600 = vmatprep.subr.mxu0 0.0
    %601 = vmatpush1.msra.mxu0 0.0
    %602 = vmatprep.subr.mxu0 0.0
    %603 = vmatpush1.msra.mxu0 0.0
    %604 = vmatprep.subr.mxu0 0.0
    %605 = vmatpush1.msra.mxu0 0.0
    %606 = vmatprep.subr.mxu0 0.0
    %607 = vmatpush1.msra.mxu0 0.0
    %608 = vmatprep.subr.mxu0 0.0
    %609 = vmatpush1.msra.mxu0 0.0
    %610 = vmatprep.subr.mxu0 0.0
    %611 = vmatpush1.msra.mxu0 0.0
    %612 = vmatprep.subr.mxu0 0.0
    %613 = vmatpush1.msra.mxu0 0.0
    %614 = vmatprep.subr.mxu0 0.0
    %615 = vmatpush1.msra.mxu0 0.0
    %616 = vmatprep.subr.mxu0 0.0
    %617 = vmatpush1.msra.mxu0 0.0
    %618 = vmatprep.subr.mxu0 0.0
    %619 = vmatpush1.msra.mxu0 0.0
    %620 = vmatprep.subr.mxu0 0.0
    %621 = vmatpush1.msra.mxu0 0.0
    %622 = vmatprep.subr.mxu0 0.0
    %623 = vmatpush1.msra.mxu0 0.0
    %624 = vmatprep.subr.mxu0 0.0
    %625 = vmatpush1.msra.mxu0 0.0
    %626 = vmatprep.subr.mxu0 0.0
    %627 = vmatpush1.msra.mxu0 0.0
    %628 = vmatprep.subr.mxu0 0.0
    %629 = vmatpush1.msra.mxu0 0.0
    %630 = vmatprep.subr.mxu0 0.0
    %631 = vmatpush1.msra.mxu0 0.0
    %632 = vmatprep.subr.mxu0 0.0
    %633 = vmatpush1.msra.mxu0 0.0
    %634 = vmatprep.subr.mxu0 0.0
    %635 = vmatpush1.msra.mxu0 0.0
    %636 = vmatprep.subr.mxu0 0.0
    %637 = vmatpush1.msra.mxu0 0.0
    %638 = vmatprep.subr.mxu0 0.0
    %639 = vmatpush1.msra.mxu0 0.0
    %640 = vmatprep.subr.mxu0 0.0
    %641 = vmatpush1.msra.mxu0 0.0
    %642 = vmatprep.subr.mxu0 0.0
    %643 = vmatpush1.msra.mxu0 0.0
    %644 = vmatprep.subr.mxu0 0.0
    %645 = vmatpush1.msra.mxu0 0.0
    %646 = vmatprep.subr.mxu0 0.0
    %647 = vmatpush1.msra.mxu0 0.0
    %648 = vmatprep.mubr.f32.mxu0 0.0
    %649 = vmatmul.mubr.f32.gmra.mrb[0].mxu0 %v125
    %v650 = vpop.f32.mrb[0].mxu0
    %v651 = vadd.f32 0.0, %v650
    %v652 = vpop.f32.mrb[0].mxu0
    %653 = vdwg.mxu0
    %654 = vmatprep.subr.mxu0 0.0
    %655 = vmatpush1.msra.mxu0 %v581
    %656 = vmatprep.subr.mxu0 0.0
    %657 = vmatpush1.msra.mxu0 0.0
    %658 = vmatprep.subr.mxu0 0.0
    %659 = vmatpush1.msra.mxu0 0.0
    %660 = vmatprep.subr.mxu0 0.0
    %661 = vmatpush1.msra.mxu0 0.0
    %662 = vmatprep.subr.mxu0 0.0
    %663 = vmatpush1.msra.mxu0 0.0
    %664 = vmatprep.subr.mxu0 0.0
    %665 = vmatpush1.msra.mxu0 0.0
    %666 = vmatprep.subr.mxu0 0.0
    %667 = vmatpush1.msra.mxu0 0.0
    %668 = vmatprep.subr.mxu0 0.0
    %669 = vmatpush1.msra.mxu0 0.0
    %670 = vmatprep.subr.mxu0 0.0
    %671 = vmatpush1.msra.mxu0 0.0
    %672 = vmatprep.subr.mxu0 0.0
    %673 = vmatpush1.msra.mxu0 0.0
    %674 = vmatprep.subr.mxu0 0.0
    %675 = vmatpush1.msra.mxu0 0.0
    %676 = vmatprep.subr.mxu0 0.0
    %677 = vmatpush1.msra.mxu0 0.0
    %678 = vmatprep.subr.mxu0 0.0
    %679 = vmatpush1.msra.mxu0 0.0
    %680 = vmatprep.subr.mxu0 0.0
    %681 = vmatpush1.msra.mxu0 0.0
    %682 = vmatprep.subr.mxu0 0.0
    %683 = vmatpush1.msra.mxu0 0.0
    %684 = vmatprep.subr.mxu0 0.0
    %685 = vmatpush1.msra.mxu0 0.0
    %686 = vmatprep.subr.mxu0 0.0
    %687 = vmatpush1.msra.mxu0 0.0
    %688 = vmatprep.subr.mxu0 0.0
    %689 = vmatpush1.msra.mxu0 0.0
    %690 = vmatprep.subr.mxu0 0.0
    %691 = vmatpush1.msra.mxu0 0.0
    %692 = vmatprep.subr.mxu0 0.0
    %693 = vmatpush1.msra.mxu0 0.0
    %694 = vmatprep.subr.mxu0 0.0
    %695 = vmatpush1.msra.mxu0 0.0
    %696 = vmatprep.subr.mxu0 0.0
    %697 = vmatpush1.msra.mxu0 0.0
    %698 = vmatprep.subr.mxu0 0.0
    %699 = vmatpush1.msra.mxu0 0.0
    %700 = vmatprep.subr.mxu0 0.0
    %701 = vmatpush1.msra.mxu0 0.0
    %702 = vmatprep.subr.mxu0 0.0
    %703 = vmatpush1.msra.mxu0 0.0
    %704 = vmatprep.subr.mxu0 0.0
    %705 = vmatpush1.msra.mxu0 0.0
    %706 = vmatprep.subr.mxu0 0.0
    %707 = vmatpush1.msra.mxu0 0.0
    %708 = vmatprep.subr.mxu0 0.0
    %709 = vmatpush1.msra.mxu0 0.0
    %710 = vmatprep.subr.mxu0 0.0
    %711 = vmatpush1.msra.mxu0 0.0
    %712 = vmatprep.subr.mxu0 0.0
    %713 = vmatpush1.msra.mxu0 0.0
    %714 = vmatprep.subr.mxu0 0.0
    %715 = vmatpush1.msra.mxu0 0.0
    %716 = vmatprep.subr.mxu0 0.0
    %717 = vmatpush1.msra.mxu0 0.0
    %718 = vmatprep.mubr.f32.mxu0 0.0
    %719 = vmatmul.mubr.f32.gmra.mrb[0].mxu0 %v197
    %v720 = vpop.f32.mrb[0].mxu0
    %v721 = vadd.f32 0.0, %v720
    %v722 = vpop.f32.mrb[0].mxu0
    %723 = vdwg.mxu0
    %v724 = vmax.f32 %v651, 0.0
    %v725 = vmax.f32 %v721, 0.0
    %726 = vst.msk [vmem:[%s4] sm:$0xff] %vm40, %v724
    %727 = vst.msk [vmem:[%s4 + $0x8] sm:$0xff] %vm40, %v725
    // Predicated region
    $region22: #{tpu_custom_call.1} parent=1 // pred_check
      _
    $region23: #{tpu_custom_call.1} parent=1 // pred_check_branch
      %729 = sbr.rel (0) target = $region25
    $region24: #{tpu_custom_call.1} parent=1 // pred_region
      _
    $region25: #{tpu_custom_call.1} parent=1 // pred_fallthru
      _
    // Predicated region
    $region26: #{tpu_custom_call.1} parent=1 // pred_check
      _
    $region27: #{tpu_custom_call.1} parent=1 // pred_check_branch
      %731 = sbr.rel (0) target = $region29
    $region28: #{tpu_custom_call.1} parent=1 // pred_region
      _
    $region29: #{tpu_custom_call.1} parent=1 // pred_fallthru
      _
    %732 = vsyncpa [#allocation3], 1

</llo_original>
